<compile_context>
chip_gen: v7x
topology: tpu7x:2x2x1
jax: 0.10.0
libtpu: 0.0.40
codegen_flags: <defaults>
</compile_context>

<pallas_src>
import functools

import jax
import jax.numpy as jnp
from jax.experimental import pallas as pl
from jax.experimental.pallas import tpu as pltpu

EPSILON = 1e-6
_S_TILE_CAP = 65536                 # lanes; beyond ~64K the step overhead is already amortized
_MASK_RESIDENT_MAX_BYTES = 8 << 20  # keep the mask resident in VMEM below this size


def _round_up(x, m):
    return ((x + m - 1) // m) * m


def _dice_partial_kernel(mask_ref, pred_ref, targ_ref, inter_ref, union_ref,
                         inter_acc, union_acc, *, mask_resident, s_valid):
    """grid = (n_split, c_blocks, s_per); axis 2 is the spatial reduction axis."""
    sp = pl.program_id(0)
    s = pl.program_id(2)
    n_s = pl.num_programs(2)
    s_tile = pred_ref.shape[-1]
    tile_idx = sp * n_s + s                       # global spatial-tile index

    @pl.when(s == 0)
    def _():
        inter_acc[...] = jnp.zeros_like(inter_acc)
        union_acc[...] = jnp.zeros_like(union_acc)

    # Mask tile, shape (1, 1, s_tile), values {0, 1} in f32.
    if mask_resident:
        m = mask_ref[pl.ds(tile_idx, 1)]          # resident mask: pick the current tile
    else:
        m = mask_ref[...]                         # per-step tiled mask

    # Sigmoid via a single EUP push (tanh); cast to f32 in-register.
    x = pred_ref[...].astype(jnp.float32)         # (B, CB, TS)
    p = 0.5 * jnp.tanh(0.5 * x) + 0.5
    t = targ_ref[...].astype(jnp.float32)         # (B, CB, TS)

    if s_valid is not None:
        # Tail tile: zero out-of-range lanes (OOB block data may be garbage/NaN,
        # and NaN * 0 would corrupt the accumulators).
        lane = jax.lax.broadcasted_iota(jnp.int32, (1, 1, s_tile), 2)
        valid = (tile_idx * s_tile + lane) < s_valid
        p = jnp.where(valid, p, 0.0)
        t = jnp.where(valid, t, 0.0)

    # Hot loop is pure VPU work (muls/adds); mask applied after the batch sum.
    inter_acc[...] += jnp.sum(p * t, axis=0, keepdims=True) * m
    union_acc[...] += jnp.sum(p + t, axis=0, keepdims=True) * m

    @pl.when(s == n_s - 1)
    def _():
        # One cross-lane (XLU) reduce + relayout per reduction, not per step.
        cb = inter_ref.shape[-1]
        inter_ref[...] = jnp.sum(inter_acc[...], axis=(0, 2)).reshape(1, 1, 1, cb)
        union_ref[...] = jnp.sum(union_acc[...], axis=(0, 2)).reshape(1, 1, 1, cb)


@jax.jit
def custom_dice_loss(predictions, targets, batch_idx=None):
    """Pallas implementation of CustomDiceLoss.forward (batch_idx is unused)."""
    del batch_idx  # unused, as in the PyTorch module
    B, C, H, W = predictions.shape
    assert targets.shape == (B, C + 1, H, W)
    S = H * W

    # Free reshapes; no padding / dtype conversion of the two large arrays.
    pred = predictions.reshape(B, C, S)
    # TODO(synk): the channel slice is one extra HBM pass over targets; avoiding
    # it would require the caller to pass class targets and the mask separately.
    targ = targets[:, 1:].reshape(B, C, S)
    mask_flat = (targets[0, 0].reshape(S) == 0).astype(jnp.float32)

    # ---------------- tiling / VMEM budget (generation aware) ----------------
    c_block = C if C <= 8 else 8                  # ==C (full dim) or a multiple of 8
    c_blocks = pl.cdiv(C, c_block)

    pred_item = predictions.dtype.itemsize
    targ_item = targets.dtype.itemsize

    try:
        vmem_cap = int(pltpu.get_tpu_info().vmem_capacity_bytes)
    except Exception:
        vmem_cap = 64 << 20                       # v7x per-TC capacity (smallest case)
    budget = min(int(vmem_cap * 0.5), 40 << 20)

    s128 = _round_up(S, 128)
    mask_resident = (s128 * 4) <= _MASK_RESIDENT_MAX_BYTES

    lane_bytes = (2 * B * c_block * (pred_item + targ_item)   # double-buffered inputs
                  + 2 * c_block * 4)                          # f32 lane-partial accumulators
    if not mask_resident:
        lane_bytes += 2 * 4                                   # tiled mask buffers
    avail = budget - (2 * s128 * 4 if mask_resident else 0) - (2 << 20)
    s_tile_budget = max((avail // lane_bytes) // 128 * 128, 128)
    s_tile = int(min(s128, _S_TILE_CAP, s_tile_budget))       # lane-dense, multiple of 128

    s_tiles_total = pl.cdiv(S, s_tile)
    # Guarantee >=2 iterations on the parallel axes (v7x has 2 TensorCores).
    n_split = 2 if (c_blocks == 1 and s_tiles_total % 2 == 0) else 1
    s_per = s_tiles_total // n_split
    s_cover = s_tiles_total * s_tile
    s_valid = S if s_cover != S else None

    # Only the tiny mask vector is padded (to full tile coverage, with zeros).
    if s_cover != S:
        mask_flat = jnp.pad(mask_flat, (0, s_cover - S))
    mask3 = mask_flat.reshape(s_tiles_total, 1, s_tile)

    if mask_resident:
        mask_spec = pl.BlockSpec((s_tiles_total, 1, s_tile), lambda sp, c, s: (0, 0, 0))
    else:
        mask_spec = pl.BlockSpec((1, 1, s_tile),
                                 lambda sp, c, s: (sp * s_per + s, 0, 0))

    def _data_spec():
        return pl.BlockSpec((B, c_block, s_tile),
                            lambda sp, c, s: (0, c, sp * s_per + s))

    out_spec = pl.BlockSpec((1, 1, 1, c_block), lambda sp, c, s: (sp, c, 0, 0))

    est_vmem = (2 * B * c_block * s_tile * (pred_item + targ_item)
                + 2 * c_block * s_tile * 4
                + (2 * s_cover * 4 if mask_resident else 2 * s_tile * 4))
    vmem_limit = int(min(max(2 * est_vmem, 32 << 20), 56 << 20))

    kernel = functools.partial(_dice_partial_kernel,
                               mask_resident=mask_resident, s_valid=s_valid)

    inter, union = pl.pallas_call(
        kernel,
        out_shape=(jax.ShapeDtypeStruct((n_split, c_blocks, 1, c_block), jnp.float32),
                   jax.ShapeDtypeStruct((n_split, c_blocks, 1, c_block), jnp.float32)),
        grid_spec=pltpu.PrefetchScalarGridSpec(
            num_scalar_prefetch=0,
            grid=(n_split, c_blocks, s_per),
            in_specs=[mask_spec, _data_spec(), _data_spec()],
            out_specs=[out_spec, out_spec],
            scratch_shapes=[
                pltpu.VMEM((1, c_block, s_tile), jnp.float32),  # intersection partials
                pltpu.VMEM((1, c_block, s_tile), jnp.float32),  # union partials
            ],
        ),
        compiler_params=pltpu.CompilerParams(
            dimension_semantics=("parallel", "parallel", "arbitrary"),
            vmem_limit_bytes=vmem_limit),
    )(mask3, pred, targ)

    # Combine spatial splits, drop any padded channels, finish dice in f32.
    inter = jnp.sum(inter, axis=0).reshape(-1)[:C]
    union = jnp.sum(union, axis=0).reshape(-1)[:C]
    dice = (2.0 * inter + EPSILON) / (union + EPSILON)
    return (jnp.sum(dice) / jnp.float32(C)).reshape((1,))


def _reference(predictions, targets):
    """Pure-JAX reference mirroring the PyTorch code."""
    mask = (targets[0, 0] == 0).astype(jnp.float32)             # (H, W)
    p = jax.nn.sigmoid(predictions.astype(jnp.float32))         # (B, C, H, W)
    t = targets[:, 1:].astype(jnp.float32)
    m = mask[None, None, :, :]
    inter = jnp.sum(p * t * m, axis=(0, 2, 3))
    union = jnp.sum(p * m, axis=(0, 2, 3)) + jnp.sum(t * m, axis=(0, 2, 3))
    dice = (2.0 * inter + EPSILON) / (union + EPSILON)
    return jnp.mean(dice).reshape((1,))


if __name__ == "__main__":
    B, C, H, W = 2, 4, 16, 16
    key = jax.random.PRNGKey(0)
    k1, k2 = jax.random.split(key)

    predictions = jax.random.normal(k1, (B, C, H, W), dtype=jnp.float32)
    # Binary targets so that channel 0 contains exact zeros (defines the mask).
    targets = (jax.random.uniform(k2, (B, C + 1, H, W)) > 0.5).astype(jnp.float32)

    loss = custom_dice_loss(predictions, targets)
    loss = jax.block_until_ready(loss)

    ref = _reference(predictions, targets)
    assert loss.shape == (1,)
    assert jnp.allclose(loss, ref, atol=1e-5, rtol=1e-5), (loss, ref)

    print("KERNEL_OK")
</pallas_src>

<mosaic_0001>
module attributes {stable_mosaic.version = 11 : i64} {
  func.func @_dice_partial_kernel(%arg0: i32, %arg1: i32, %arg2: i32, %arg3: memref<1x1x256xf32, #tpu.memory_space<vmem>>, %arg4: memref<2x4x256xf32, #tpu.memory_space<vmem>>, %arg5: memref<2x4x256xf32, #tpu.memory_space<vmem>>, %arg6: memref<1x1x1x4xf32, #tpu.memory_space<vmem>>, %arg7: memref<1x1x1x4xf32, #tpu.memory_space<vmem>>, %arg8: memref<1x4x256xf32, #tpu.memory_space<vmem>>, %arg9: memref<1x4x256xf32, #tpu.memory_space<vmem>>) attributes {dimension_semantics = [#tpu.dimension_semantics<parallel>, #tpu.dimension_semantics<parallel>, #tpu.dimension_semantics<arbitrary>], iteration_bounds = array<i64: 1, 1, 1>, scalar_prefetch = 0 : i64, scratch_operands = 2 : i64, tpu.core_type = #tpu.core_type<tc>, window_params = [{pipeline_mode = #tpu.pipeline_mode<synchronous>, transform_indices = @transform_0, window_bounds = array<i64: 1, 1, 256>}, {transform_indices = @transform_1, window_bounds = array<i64: 2, 4, 256>}, {transform_indices = @transform_2, window_bounds = array<i64: 2, 4, 256>}, {transform_indices = @transform_3, window_bounds = array<i64: 1, 1, 1, 4>}, {transform_indices = @transform_4, window_bounds = array<i64: 1, 1, 1, 4>}]} {
    %c1_i32 = arith.constant 1 : i32
    %0 = arith.muli %arg0, %c1_i32 : i32
    %1 = arith.addi %0, %arg2 : i32
    %c0_i32 = arith.constant 0 : i32
    %2 = arith.cmpi eq, %arg2, %c0_i32 : i32
    %3 = arith.extui %2 : i1 to i32
    %c0_i32_0 = arith.constant 0 : i32
    %4 = arith.cmpi ne, %3, %c0_i32_0 : i32
    scf.if %4 {
      %cst_26 = arith.constant 0.000000e+00 : f32
      %35 = vector.broadcast %cst_26 : f32 to vector<1x4x256xf32>
      %c0_27 = arith.constant 0 : index
      %c0_28 = arith.constant 0 : index
      %c0_29 = arith.constant 0 : index
      %36 = vector.load %arg8[%c0_27, %c0_28, %c0_29] : memref<1x4x256xf32, #tpu.memory_space<vmem>>, vector<1x4x256xf32>
      tpu.vector_store %arg8[%c0_27, %c0_28, %c0_29], %35 {strides = array<i32>} : memref<1x4x256xf32, #tpu.memory_space<vmem>>, vector<1x4x256xf32>,
      %cst_30 = arith.constant 0.000000e+00 : f32
      %37 = vector.broadcast %cst_30 : f32 to vector<1x4x256xf32>
      %c0_31 = arith.constant 0 : index
      %c0_32 = arith.constant 0 : index
      %c0_33 = arith.constant 0 : index
      %38 = vector.load %arg9[%c0_31, %c0_32, %c0_33] : memref<1x4x256xf32, #tpu.memory_space<vmem>>, vector<1x4x256xf32>
      tpu.vector_store %arg9[%c0_31, %c0_32, %c0_33], %37 {strides = array<i32>} : memref<1x4x256xf32, #tpu.memory_space<vmem>>, vector<1x4x256xf32>,
    } else {
    }
    %5 = arith.index_cast %1 : i32 to index
    %c0 = arith.constant 0 : index
    %c0_1 = arith.constant 0 : index
    %6 = vector.load %arg3[%5, %c0, %c0_1] : memref<1x1x256xf32, #tpu.memory_space<vmem>>, vector<1x1x256xf32>
    %c0_2 = arith.constant 0 : index
    %c0_3 = arith.constant 0 : index
    %c0_4 = arith.constant 0 : index
    %7 = vector.load %arg4[%c0_2, %c0_3, %c0_4] : memref<2x4x256xf32, #tpu.memory_space<vmem>>, vector<2x4x256xf32>
    %cst = arith.constant 5.000000e-01 : f32
    %8 = vector.broadcast %cst : f32 to vector<2x4x256xf32>
    %9 = arith.mulf %8, %7 : vector<2x4x256xf32>
    %10 = math.tanh %9 : vector<2x4x256xf32>
    %cst_5 = arith.constant 5.000000e-01 : f32
    %11 = vector.broadcast %cst_5 : f32 to vector<2x4x256xf32>
    %12 = arith.mulf %11, %10 : vector<2x4x256xf32>
    %cst_6 = arith.constant 5.000000e-01 : f32
    %13 = vector.broadcast %cst_6 : f32 to vector<2x4x256xf32>
    %14 = arith.addf %12, %13 : vector<2x4x256xf32>
    %c0_7 = arith.constant 0 : index
    %c0_8 = arith.constant 0 : index
    %c0_9 = arith.constant 0 : index
    %15 = vector.load %arg5[%c0_7, %c0_8, %c0_9] : memref<2x4x256xf32, #tpu.memory_space<vmem>>, vector<2x4x256xf32>
    %c0_10 = arith.constant 0 : index
    %c0_11 = arith.constant 0 : index
    %c0_12 = arith.constant 0 : index
    %16 = vector.load %arg8[%c0_10, %c0_11, %c0_12] : memref<1x4x256xf32, #tpu.memory_space<vmem>>, vector<1x4x256xf32>
    %17 = arith.mulf %14, %15 : vector<2x4x256xf32>
    %cst_13 = arith.constant dense<0.000000e+00> : vector<4x256xf32>
    %18 = vector.multi_reduction <add>, %17, %cst_13 [0] : vector<2x4x256xf32> to vector<4x256xf32>
    %19 = vector.shape_cast %18 : vector<4x256xf32> to vector<1x4x256xf32>
    %20 = vector.broadcast %6 : vector<1x1x256xf32> to vector<1x4x256xf32>
    %21 = arith.mulf %19, %20 : vector<1x4x256xf32>
    %22 = arith.addf %16, %21 : vector<1x4x256xf32>
    %c0_14 = arith.constant 0 : index
    %c0_15 = arith.constant 0 : index
    %c0_16 = arith.constant 0 : index
    %23 = vector.load %arg8[%c0_14, %c0_15, %c0_16] : memref<1x4x256xf32, #tpu.memory_space<vmem>>, vector<1x4x256xf32>
    tpu.vector_store %arg8[%c0_14, %c0_15, %c0_16], %22 {strides = array<i32>} : memref<1x4x256xf32, #tpu.memory_space<vmem>>, vector<1x4x256xf32>,
    %c0_17 = arith.constant 0 : index
    %c0_18 = arith.constant 0 : index
    %c0_19 = arith.constant 0 : index
    %24 = vector.load %arg9[%c0_17, %c0_18, %c0_19] : memref<1x4x256xf32, #tpu.memory_space<vmem>>, vector<1x4x256xf32>
    %25 = arith.addf %14, %15 : vector<2x4x256xf32>
    %cst_20 = arith.constant dense<0.000000e+00> : vector<4x256xf32>
    %26 = vector.multi_reduction <add>, %25, %cst_20 [0] : vector<2x4x256xf32> to vector<4x256xf32>
    %27 = vector.shape_cast %26 : vector<4x256xf32> to vector<1x4x256xf32>
    %28 = vector.broadcast %6 : vector<1x1x256xf32> to vector<1x4x256xf32>
    %29 = arith.mulf %27, %28 : vector<1x4x256xf32>
    %30 = arith.addf %24, %29 : vector<1x4x256xf32>
    %c0_21 = arith.constant 0 : index
    %c0_22 = arith.constant 0 : index
    %c0_23 = arith.constant 0 : index
    %31 = vector.load %arg9[%c0_21, %c0_22, %c0_23] : memref<1x4x256xf32, #tpu.memory_space<vmem>>, vector<1x4x256xf32>
    tpu.vector_store %arg9[%c0_21, %c0_22, %c0_23], %30 {strides = array<i32>} : memref<1x4x256xf32, #tpu.memory_space<vmem>>, vector<1x4x256xf32>,
    %c0_i32_24 = arith.constant 0 : i32
    %32 = arith.cmpi eq, %arg2, %c0_i32_24 : i32
    %33 = arith.extui %32 : i1 to i32
    %c0_i32_25 = arith.constant 0 : i32
    %34 = arith.cmpi ne, %33, %c0_i32_25 : i32
    scf.if %34 {
      %c0_26 = arith.constant 0 : index
      %c0_27 = arith.constant 0 : index
      %c0_28 = arith.constant 0 : index
      %35 = vector.load %arg8[%c0_26, %c0_27, %c0_28] : memref<1x4x256xf32, #tpu.memory_space<vmem>>, vector<1x4x256xf32>
      %cst_29 = arith.constant dense<0.000000e+00> : vector<4xf32>
      %36 = vector.multi_reduction <add>, %35, %cst_29 [0, 2] : vector<1x4x256xf32> to vector<4xf32>
      %37 = vector.shape_cast %36 : vector<4xf32> to vector<1x1x1x4xf32>
      %c0_30 = arith.constant 0 : index
      %c0_31 = arith.constant 0 : index
      %c0_32 = arith.constant 0 : index
      %c0_33 = arith.constant 0 : index
      %38 = vector.load %arg6[%c0_30, %c0_31, %c0_32, %c0_33] : memref<1x1x1x4xf32, #tpu.memory_space<vmem>>, vector<1x1x1x4xf32>
      tpu.vector_store %arg6[%c0_30, %c0_31, %c0_32, %c0_33], %37 {strides = array<i32>} : memref<1x1x1x4xf32, #tpu.memory_space<vmem>>, vector<1x1x1x4xf32>,
      %c0_34 = arith.constant 0 : index
      %c0_35 = arith.constant 0 : index
      %c0_36 = arith.constant 0 : index
      %39 = vector.load %arg9[%c0_34, %c0_35, %c0_36] : memref<1x4x256xf32, #tpu.memory_space<vmem>>, vector<1x4x256xf32>
      %cst_37 = arith.constant dense<0.000000e+00> : vector<4xf32>
      %40 = vector.multi_reduction <add>, %39, %cst_37 [0, 2] : vector<1x4x256xf32> to vector<4xf32>
      %41 = vector.shape_cast %40 : vector<4xf32> to vector<1x1x1x4xf32>
      %c0_38 = arith.constant 0 : index
      %c0_39 = arith.constant 0 : index
      %c0_40 = arith.constant 0 : index
      %c0_41 = arith.constant 0 : index
      %42 = vector.load %arg7[%c0_38, %c0_39, %c0_40, %c0_41] : memref<1x1x1x4xf32, #tpu.memory_space<vmem>>, vector<1x1x1x4xf32>
      tpu.vector_store %arg7[%c0_38, %c0_39, %c0_40, %c0_41], %41 {strides = array<i32>} : memref<1x1x1x4xf32, #tpu.memory_space<vmem>>, vector<1x1x1x4xf32>,
    } else {
    }
    return
  }
  func.func @transform_0(%arg0: i32, %arg1: i32, %arg2: i32) -> (i32, i32, i32) {
    %c0_i32 = arith.constant 0 : i32
    %c0_i32_0 = arith.constant 0 : i32
    %c0_i32_1 = arith.constant 0 : i32
    %c0_i32_2 = arith.constant 0 : i32
    return %c0_i32, %c0_i32_0, %c0_i32_1 : i32, i32, i32
  }
  func.func @transform_1(%arg0: i32, %arg1: i32, %arg2: i32) -> (i32, i32, i32) {
    %c1_i32 = arith.constant 1 : i32
    %0 = arith.muli %arg0, %c1_i32 : i32
    %1 = arith.addi %0, %arg2 : i32
    %c0_i32 = arith.constant 0 : i32
    %c0_i32_0 = arith.constant 0 : i32
    return %c0_i32, %arg1, %1 : i32, i32, i32
  }
  func.func @transform_2(%arg0: i32, %arg1: i32, %arg2: i32) -> (i32, i32, i32) {
    %c1_i32 = arith.constant 1 : i32
    %0 = arith.muli %arg0, %c1_i32 : i32
    %1 = arith.addi %0, %arg2 : i32
    %c0_i32 = arith.constant 0 : i32
    %c0_i32_0 = arith.constant 0 : i32
    return %c0_i32, %arg1, %1 : i32, i32, i32
  }
  func.func @transform_3(%arg0: i32, %arg1: i32, %arg2: i32) -> (i32, i32, i32, i32) {
    %c0_i32 = arith.constant 0 : i32
    %c0_i32_0 = arith.constant 0 : i32
    %c0_i32_1 = arith.constant 0 : i32
    return %arg0, %arg1, %c0_i32, %c0_i32_0 : i32, i32, i32, i32
  }
  func.func @transform_4(%arg0: i32, %arg1: i32, %arg2: i32) -> (i32, i32, i32, i32) {
    %c0_i32 = arith.constant 0 : i32
    %c0_i32_0 = arith.constant 0 : i32
    %c0_i32_1 = arith.constant 0 : i32
    return %arg0, %arg1, %c0_i32, %c0_i32_0 : i32, i32, i32, i32
  }
}

</mosaic_0001>

<llo_original>
// kernel: custom_dice_loss.1
$region0: #{custom_dice_loss.1}
  #allocation0 [shape = 'u32[]', space=smem, size = 0x4, offset = 0x4, fixed_abs, tag = 'smem constant byte address 0x4 - core index']
  #allocation1 [shape = 'u32[144,128]{1,0:T(1,128)}', space=vmem, size = 0x12000, scoped, tag = 'internal scratch']
  #allocation2 [shape = 'f32[1,4,256]{2,1,0:T(4,128)}', space=vmem, size = 0x1000, scoped, tag = 'scratch operand']
  #allocation3 [shape = 'f32[1,4,256]{2,1,0:T(4,128)}', space=vmem, size = 0x1000, scoped, tag = 'scratch operand']
  %s0 = inlined_call_operand.vmem [shape: f32[1,1,256], index: 0, kind: input, shape index: {}]
  %s1 = inlined_call_operand.vmem [shape: f32[2,4,256], index: 1, kind: input, shape index: {}]
  %s2 = inlined_call_operand.vmem [shape: f32[2,4,256], index: 2, kind: input, shape index: {}]
  %s3 = inlined_call_operand.vmem [shape: f32[1,1,1,4], index: 3, kind: output, shape index: {0}]
  %s4 = inlined_call_operand.vmem [shape: f32[1,1,1,4], index: 4, kind: output, shape index: {1}]
  %5 = xla_tuple %s3, %s4
  %s6 = sld [smem:[#allocation0]]
  $region38: #{custom_dice_loss.1} parent=0
    _
  %s8 = ssub.s32 1, %s6
  %s9 = scalar_select 0, %s8, %s6
  // Predicated region
  $region2: #{custom_dice_loss.1} parent=0 // pred_check
    _
  $region3: #{custom_dice_loss.1} parent=0 // pred_check_branch
    %11 = sbr.rel (0) target = $region5
  $region4: #{custom_dice_loss.1} parent=0 // pred_region
    _
  $region5: #{custom_dice_loss.1} parent=0 // pred_fallthru
    _
  // Predicated region
  $region6: #{custom_dice_loss.1} parent=0 // pred_check
    _
  $region7: #{custom_dice_loss.1} parent=0 // pred_check_branch
    %13 = sbr.rel (0) target = $region9
  $region8: #{custom_dice_loss.1} parent=0 // pred_region
    %s14 = sadd.s32 0, 0
    %s15 = smul.u32 2, %s14
    %p16 = scmp.lt.s32.totalorder %s15, 1
    %s17 = scalar_select %p16, %s15, 1
    %s18 = smul.addr %s17, 4
    %s19 = scalar_lea.vmem %s1, %s18
    %s20 = sadd.s32 0, 0
    %s21 = smul.u32 2, %s20
  $region9: #{custom_dice_loss.1} parent=0 // pred_fallthru
    _
  // Predicated region
  $region10: #{custom_dice_loss.1} parent=0 // pred_check
    _
  $region11: #{custom_dice_loss.1} parent=0 // pred_check_branch
    %23 = sbr.rel (0) target = $region13
  $region12: #{custom_dice_loss.1} parent=0 // pred_region
    %s24 = sadd.s32 0, 0
    %s25 = smul.u32 2, %s24
    %p26 = scmp.lt.s32.totalorder %s25, 1
    %s27 = scalar_select %p26, %s25, 1
    %s28 = smul.addr %s27, 4
    %s29 = scalar_lea.vmem %s2, %s28
    %s30 = sadd.s32 0, 0
    %s31 = smul.u32 2, %s30
  $region13: #{custom_dice_loss.1} parent=0 // pred_fallthru
    _
  %s32 = sadd.s32 0, 0
  %s33 = smul.u32 2, %s32
  %p34 = scmp.lt.s32.totalorder %s33, 1
  %s35 = scalar_select %p34, %s33, 1
  %s36 = smul.addr %s35, 4
  %s37 = scalar_lea.vmem %s1, %s36
  %s38 = sadd.s32 0, 0
  %s39 = smul.u32 2, %s38
  %p40 = scmp.lt.s32.totalorder %s39, 1
  %s41 = scalar_select %p40, %s39, 1
  %s42 = smul.addr %s41, 4
  %s43 = scalar_lea.vmem %s2, %s42
  %s44 = sadd.s32 0, 0
  %s45 = smul.u32 2, %s44
  %p46 = scmp.lt.s32.totalorder %s45, 1
  %s47 = scalar_select %p46, %s45, 1
  %s48 = smul.addr %s47, 4
  %s49 = scalar_lea.vmem %s1, %s48
  %s50 = sadd.s32 0, 0
  %s51 = smul.u32 2, %s50
  %s52 = sadd.s32 0, 0
  %s53 = smul.u32 2, %s52
  %p54 = scmp.lt.s32.totalorder %s53, 1
  %s55 = scalar_select %p54, %s53, 1
  %s56 = smul.addr %s55, 4
  %s57 = scalar_lea.vmem %s2, %s56
  %s58 = sadd.s32 0, 0
  %s59 = smul.u32 2, %s58
  %s60 = sadd.s32 0, 0
  %p61 = scmp.eq.s32.totalorder 0, 0
  // Predicated region
  $region14: #{custom_dice_loss.1} parent=0 // pred_check
    %p62 = pneg %p61
  $region15: #{custom_dice_loss.1} parent=0 // pred_check_branch
    %64 = sbr.rel (%p62) target = $region17
  $region16: #{custom_dice_loss.1} parent=0 // pred_region
    %65 = vst [vmem:[#allocation2] sm:$0xff] 0.0
    %66 = vst [vmem:[#allocation3] sm:$0xff] 0.0
  $region17: #{custom_dice_loss.1} parent=0 // pred_fallthru
    _
  %s67 = smul.u32 %s60, 2
  %s68 = scalar_lea.vmem %s0, %s67
  %v69 = vld [vmem:[%s68] sm:$0x3]
  %v70 = vld [vmem:[%s49] sm:$0xff]
  %v71 = vld [vmem:[%s49 + $0x8] sm:$0xff]
  %v72 = vmul.f32 %v70, 0.5
  %v73 = vmul.f32 %v71, 0.5
  %v74 = vtanh.pop %v72
  %v75 = vtanh.pop %v73
  %v76 = vmul.f32 %v74, 0.5
  %v77 = vmul.f32 %v75, 0.5
  %v78 = vadd.f32 %v76, 0.5
  %v79 = vadd.f32 %v77, 0.5
  %v80 = vld [vmem:[%s57] sm:$0xff]
  %v81 = vld [vmem:[%s57 + $0x8] sm:$0xff]
  %v82 = vld [vmem:[#allocation2] sm:$0xff]
  %v83 = vmul.f32 %v78, %v80
  %v84 = vmul.f32 %v79, %v81
  %v87 = vcombine.high %v83, %v83
  %v88 = vcombine.high %v84, %v84
  %vm91 = vcmask 1043456
  %v92 = vsel %vm91, %v83, 0.0
  %v93 = vsel %vm91, %v84, 0.0
  %v94 = vadd.f32 %v92, %v93
  %v95 = vsel %vm91, %v87, 0.0
  %v96 = vsel %vm91, %v88, 0.0
  %v97 = vadd.f32 %v95, %v96
  %v99 = vlaneseq
  %v100 = vshrl.u32 %v99, 7
  %v101 = vsub.s32 0, %v100
  %v102 = vrot.slane %v69, %v101
  %v103 = vlaneseq
  %v104 = vshrl.u32 %v103, 7
  %v105 = vsub.s32 1, %v104
  %v106 = vrot.slane %v69, %v105
  %v109 = vmul.f32 %v94, %v102
  %v110 = vmul.f32 %v97, %v106
  %v113 = vcombine.low %v109, %v110
  %v115 = vadd.f32 %v82, %v113
  %116 = vst [vmem:[#allocation2] sm:$0xff] %v115
  %v117 = vld [vmem:[#allocation3] sm:$0xff]
  %v118 = vadd.f32 %v78, %v80
  %v119 = vadd.f32 %v79, %v81
  %v122 = vcombine.high %v118, %v118
  %v123 = vcombine.high %v119, %v119
  %v126 = vsel %vm91, %v118, 0.0
  %v127 = vsel %vm91, %v119, 0.0
  %v128 = vadd.f32 %v126, %v127
  %v129 = vsel %vm91, %v122, 0.0
  %v130 = vsel %vm91, %v123, 0.0
  %v131 = vadd.f32 %v129, %v130
  %v132 = vmul.f32 %v128, %v102
  %v133 = vmul.f32 %v131, %v106
  %v136 = vcombine.low %v132, %v133
  %v138 = vadd.f32 %v117, %v136
  %139 = vst [vmem:[#allocation3] sm:$0xff] %v138
  // Predicated region
  $region18: #{custom_dice_loss.1} parent=0 // pred_check
    %p140 = pneg %p61
  $region19: #{custom_dice_loss.1} parent=0 // pred_check_branch
    %142 = sbr.rel (%p140) target = $region21
  $region20: #{custom_dice_loss.1} parent=0 // pred_region
    %v143 = vld [vmem:[#allocation2] sm:$0xff]
    %v145 = vcombine.high %v143, %v143
    %v147 = vsel %vm91, %v143, 0.0
    %v148 = vsel %vm91, %v145, 0.0
    %v149 = vadd.f32 %v147, %v148
    %150 = vadd.xlane.f32.xlu0 %v149
    %v151 = vpop.xlane.xlu0 %150
    %v153 = vlaneseq
    %v154 = vand.u32 %v153, 127
    %v155 = vlaneseq
    %v156 = vshrl.u32 %v155, 7
    %v157 = vsub.s32 %v154, %v156
    %v158 = vrot.slane %v151, %v157
    %vm160 = vcmask 24576
    %161 = vst.msk [vmem:[%s3] sm:$0x1] %vm160, %v158
    %v162 = vld [vmem:[#allocation3] sm:$0xff]
    %v164 = vcombine.high %v162, %v162
    %v166 = vsel %vm91, %v162, 0.0
    %v167 = vsel %vm91, %v164, 0.0
    %v168 = vadd.f32 %v166, %v167
    %169 = vadd.xlane.f32.xlu0 %v168
    %v170 = vpop.xlane.xlu0 %169
    %v172 = vlaneseq
    %v173 = vshrl.u32 %v172, 7
    %v174 = vsub.s32 %v154, %v173
    %v175 = vrot.slane %v170, %v174
    %177 = vst.msk [vmem:[%s4] sm:$0x1] %vm160, %v175
  $region21: #{custom_dice_loss.1} parent=0 // pred_fallthru
    _
  // Predicated region
  $region22: #{custom_dice_loss.1} parent=0 // pred_check
    _
  $region23: #{custom_dice_loss.1} parent=0 // pred_check_branch
    %179 = sbr.rel (0) target = $region25
  $region24: #{custom_dice_loss.1} parent=0 // pred_region
    _
  $region25: #{custom_dice_loss.1} parent=0 // pred_fallthru
    _
  // Predicated region
  $region26: #{custom_dice_loss.1} parent=0 // pred_check
    _
  $region27: #{custom_dice_loss.1} parent=0 // pred_check_branch
    %181 = sbr.rel (0) target = $region29
  $region28: #{custom_dice_loss.1} parent=0 // pred_region
    _
  $region29: #{custom_dice_loss.1} parent=0 // pred_fallthru
    _
  // Predicated region
  $region30: #{custom_dice_loss.1} parent=0 // pred_check
    _
  $region31: #{custom_dice_loss.1} parent=0 // pred_check_branch
    %183 = sbr.rel (0) target = $region33
  $region32: #{custom_dice_loss.1} parent=0 // pred_region
    _
  $region33: #{custom_dice_loss.1} parent=0 // pred_fallthru
    _
  // Predicated region
  $region34: #{custom_dice_loss.1} parent=0 // pred_check
    _
  $region35: #{custom_dice_loss.1} parent=0 // pred_check_branch
    %185 = sbr.rel (0) target = $region37
  $region36: #{custom_dice_loss.1} parent=0 // pred_region
    _
  $region37: #{custom_dice_loss.1} parent=0 // pred_fallthru
    _

</llo_original>
